<compile_context>
chip_gen: v7x
topology: tpu7x:2x2x1
jax: 0.10.0
libtpu: 0.0.40
codegen_flags: <defaults>
</compile_context>

<pallas_src>
import jax
import jax.numpy as jnp
from jax.experimental import pallas as pl
from jax.experimental.pallas import tpu as pltpu


def _round_up(x, m):
    return (x + m - 1) // m * m


def _device_kind():
    try:
        return jax.devices()[0].device_kind.lower()
    except Exception:
        return ""


def _mxu_align():
    kind = _device_kind()
    # v2-v5 MXUs are 128x128; v6e/v7x are 256x256 -> pad K/N to 256 there.
    if any(v in kind for v in ("v2", "v3", "v4", "v5")):
        return 128
    return 256


def _vmem_cap_bytes():
    kind = _device_kind()
    # v7x: 64 MiB physical VMEM per core -> keep headroom for compiler scratch.
    if "v7" in kind:
        return 40 * 1024 * 1024
    return 100 * 1024 * 1024


def _vmem_estimate(tile_s, H_pad, TN, mm_bytes, out_bytes):
    """Rough per-kernel VMEM footprint for the chosen tile plan."""
    blocks = (
        tile_s * H_pad * mm_bytes      # x row tile
        + H_pad * H_pad * mm_bytes     # W1 (grid-invariant)
        + H_pad * 4                    # b1
        + H_pad * TN * mm_bytes        # W2 vocab tile
        + TN * 4                       # b2 vocab tile
        + tile_s * TN * out_bytes      # out tile
    )
    scratch = tile_s * H_pad * mm_bytes                    # h scratch (resident)
    interm = tile_s * H_pad * 4 + tile_s * TN * 4          # f32 dot accumulators
    return 2 * blocks + scratch + interm + (4 << 20)       # double-buffer + headroom


def _mlp_kernel(x_ref, w1_ref, b1_ref, w2_ref, b2_ref, out_ref, h_ref):
    # x_ref:   (TS, H_pad)  bf16  -- already contains embed(xt) + cond
    # w1_ref:  (H_pad, H_pad) bf16,  b1_ref: (1, H_pad) f32
    # w2_ref:  (H_pad, TN)   bf16,  b2_ref: (1, TN)    f32
    # out_ref: (TS, TN) out_dtype
    # h_ref:   (TS, H_pad) bf16 scratch, reused across every vocab tile.
    # NOTE: h is stored in bf16 (one extra rounding vs the f32 PyTorch module);
    # this matches the "matched" reference below.

    @pl.when(pl.program_id(1) == 0)
    def _():
        h = jnp.dot(x_ref[...], w1_ref[...],
                    preferred_element_type=jnp.float32) + b1_ref[...]
        h_ref[...] = jnp.maximum(h, 0.0).astype(h_ref.dtype)     # ReLU

    out_ref[...] = (
        jnp.dot(h_ref[...], w2_ref[...], preferred_element_type=jnp.float32)
        + b2_ref[...]
    ).astype(out_ref.dtype)


def diffusion_gesture_forward(xt, cond, params, *, row_tile=512, vocab_tile=512,
                              matmul_dtype=jnp.bfloat16, out_dtype=jnp.bfloat16):
    """xt: (B, S) int32 token ids, cond: (B, H) float32 -> (B, S, V) out_dtype."""
    embed, w1, b1, w2, b2 = (
        params["embed"], params["w1"], params["b1"], params["w2"], params["b2"]
    )
    B, S = xt.shape
    H = embed.shape[1]
    V = w2.shape[1]
    rows = B * S

    mm_b = jnp.dtype(matmul_dtype).itemsize
    out_b = jnp.dtype(out_dtype).itemsize

    # ---- Tile / padding plan (MXU-width aligned per chip generation) ---------
    align = _mxu_align()
    H_pad = _round_up(H, align)
    TN = _round_up(min(vocab_tile, _round_up(V, align)), align)
    tile_s = _round_up(min(row_tile, _round_up(rows, 16)), 16)   # bf16 sublane pack

    cap = _vmem_cap_bytes()
    while _vmem_estimate(tile_s, H_pad, TN, mm_b, out_b) > cap and tile_s > 16:
        tile_s = max(16, _round_up(tile_s // 2, 16))
    while _vmem_estimate(tile_s, H_pad, TN, mm_b, out_b) > cap and TN > align:
        TN = max(align, _round_up(TN // 2, align))

    V_pad = _round_up(V, TN)
    rows_pad = _round_up(rows, tile_s)
    vmem_limit = int(min(cap, max(_vmem_estimate(tile_s, H_pad, TN, mm_b, out_b),
                                  32 * 1024 * 1024)))

    # ---- Zero-pad params (zero padding is exact after the final crop) --------
    embed_p = jnp.pad(embed, ((0, 0), (0, H_pad - H))).astype(matmul_dtype)
    w1_p = jnp.pad(w1, ((0, H_pad - H), (0, H_pad - H))).astype(matmul_dtype)
    b1_p = jnp.pad(b1, ((0, 0), (0, H_pad - H))).astype(jnp.float32)
    w2_p = jnp.pad(w2, ((0, H_pad - H), (0, V_pad - V))).astype(matmul_dtype)
    b2_p = jnp.pad(b2, ((0, 0), (0, V_pad - V))).astype(jnp.float32)
    cond_p = jnp.pad(cond, ((0, 0), (0, H_pad - H))).astype(jnp.float32)

    # ---- Wrapper glue: gather + cond add + bf16 cast in one XLA fusion -------
    # TODO(synk): fuse this gather into the kernel to drop the HBM round trip.
    x = jnp.take(embed_p, xt.reshape(-1), axis=0)                 # (rows, H_pad)
    x2 = (x.reshape(B, S, H_pad).astype(jnp.float32)
          + cond_p[:, None, :]).astype(matmul_dtype).reshape(rows, H_pad)
    if rows_pad != rows:
        x2 = jnp.pad(x2, ((0, rows_pad - rows), (0, 0)))

    grid = (rows_pad // tile_s, V_pad // TN)

    grid_spec = pltpu.PrefetchScalarGridSpec(
        num_scalar_prefetch=0,
        grid=grid,
        in_specs=[
            # activations: one batch-spanning row tile per grid step on axis 0
            pl.BlockSpec((tile_s, H_pad), lambda i, j: (i, 0)),
            # grid-invariant first layer
            pl.BlockSpec((H_pad, H_pad), lambda i, j: (0, 0)),
            pl.BlockSpec((1, H_pad), lambda i, j: (0, 0)),
            # W2/b2 streamed per vocab tile
            pl.BlockSpec((H_pad, TN), lambda i, j: (0, j)),
            pl.BlockSpec((1, TN), lambda i, j: (0, j)),
        ],
        out_specs=pl.BlockSpec((tile_s, TN), lambda i, j: (i, j)),
        scratch_shapes=[pltpu.VMEM((tile_s, H_pad), matmul_dtype)],
    )

    out2 = pl.pallas_call(
        _mlp_kernel,
        out_shape=jax.ShapeDtypeStruct((rows_pad, V_pad), out_dtype),
        grid_spec=grid_spec,
        compiler_params=pltpu.CompilerParams(
            dimension_semantics=("parallel", "arbitrary"),
            vmem_limit_bytes=vmem_limit,
        ),
    )(x2, w1_p, b1_p, w2_p, b2_p)

    # Crop is a no-op when rows/V are already tile-aligned; otherwise it only
    # touches the minimally-padded (bf16) slab.
    return out2[:rows].reshape(B, S, V_pad)[:, :, :V]


def init_params(key, vocab_size, hidden_dim):
    # Note: biases drawn from scaled normal (PyTorch Linear uses uniform) —
    # fidelity nit only, does not change the forward-pass structure.
    k0, k1, k2, k3, k4 = jax.random.split(key, 5)
    scale = 1.0 / jnp.sqrt(hidden_dim)
    return {
        "embed": jax.random.normal(k0, (vocab_size, hidden_dim), jnp.float32),
        # stored as (in, out) so the kernel does x @ W + b
        "w1": scale * jax.random.normal(k1, (hidden_dim, hidden_dim), jnp.float32),
        "b1": scale * jax.random.normal(k2, (1, hidden_dim), jnp.float32),
        "w2": scale * jax.random.normal(k3, (hidden_dim, vocab_size), jnp.float32),
        "b2": scale * jax.random.normal(k4, (1, vocab_size), jnp.float32),
    }


def _reference_f32(xt, cond, params):
    """Full-precision reference (matches the PyTorch module's math)."""
    x = jnp.take(params["embed"], xt, axis=0)
    h = jnp.maximum((x + cond[:, None, :]) @ params["w1"] + params["b1"], 0.0)
    return h @ params["w2"] + params["b2"]


def _reference_matched(xt, cond, params, mm_dtype=jnp.bfloat16,
                       out_dtype=jnp.bfloat16):
    """Reference with the same bf16-in / f32-accumulate / bf16-out numerics."""
    x = jnp.take(params["embed"], xt, axis=0).astype(mm_dtype).astype(jnp.float32)
    xc = (x + cond[:, None, :]).astype(mm_dtype)
    h = jnp.dot(xc, params["w1"].astype(mm_dtype),
                preferred_element_type=jnp.float32) + params["b1"]
    h = jnp.maximum(h, 0.0).astype(mm_dtype)
    out = jnp.dot(h, params["w2"].astype(mm_dtype),
                  preferred_element_type=jnp.float32) + params["b2"]
    return out.astype(out_dtype)


if __name__ == "__main__":
    # Small shapes consistent with the module's forward.
    B, S = 2, 8          # batch, sequence length of token ids
    H = 32               # hidden_dim
    V = 64               # vocab_size

    key = jax.random.PRNGKey(0)
    kp, kx, kc = jax.random.split(key, 3)

    params = init_params(kp, V, H)
    xt = jax.random.randint(kx, (B, S), 0, V, dtype=jnp.int32)
    cond = jax.random.normal(kc, (B, H), jnp.float32)

    out = diffusion_gesture_forward(xt, cond, params)
    out = jax.block_until_ready(out)
    assert out.shape == (B, S, V)

    out_f32 = out.astype(jnp.float32)

    # Tight check against a reference with matched (bf16-in / f32-acc / bf16-out)
    # numerics.
    ref_m = _reference_matched(xt, cond, params).astype(jnp.float32)
    assert jnp.allclose(out_f32, ref_m, atol=3e-2, rtol=3e-2), "mismatch vs matched ref"

    # Loose sanity check against the full-f32 module semantics.
    ref_f = _reference_f32(xt, cond, params)
    assert jnp.allclose(out_f32, ref_f, atol=2e-1, rtol=1e-1), "mismatch vs f32 ref"

    print("KERNEL_OK")
</pallas_src>

<mosaic_0001>
module attributes {stable_mosaic.version = 11 : i64} {
  func.func @_mlp_kernel(%arg0: i32, %arg1: i32, %arg2: memref<16x256xbf16, #tpu.memory_space<vmem>>, %arg3: memref<256x256xbf16, #tpu.memory_space<vmem>>, %arg4: memref<1x256xf32, #tpu.memory_space<vmem>>, %arg5: memref<256x256xbf16, #tpu.memory_space<vmem>>, %arg6: memref<1x256xf32, #tpu.memory_space<vmem>>, %arg7: memref<16x256xbf16, #tpu.memory_space<vmem>>, %arg8: memref<16x256xbf16, #tpu.memory_space<vmem>>) attributes {dimension_semantics = [#tpu.dimension_semantics<parallel>, #tpu.dimension_semantics<arbitrary>], iteration_bounds = array<i64: 1, 1>, scalar_prefetch = 0 : i64, scratch_operands = 1 : i64, tpu.core_type = #tpu.core_type<tc>, window_params = [{transform_indices = @transform_0, window_bounds = array<i64: 16, 256>}, {pipeline_mode = #tpu.pipeline_mode<synchronous>, transform_indices = @transform_1, window_bounds = array<i64: 256, 256>}, {pipeline_mode = #tpu.pipeline_mode<synchronous>, transform_indices = @transform_2, window_bounds = array<i64: 1, 256>}, {transform_indices = @transform_3, window_bounds = array<i64: 256, 256>}, {transform_indices = @transform_4, window_bounds = array<i64: 1, 256>}, {transform_indices = @transform_5, window_bounds = array<i64: 16, 256>}]} {
    %c0_i32 = arith.constant 0 : i32
    %0 = arith.cmpi eq, %arg1, %c0_i32 : i32
    %1 = arith.extui %0 : i1 to i32
    %c0_i32_0 = arith.constant 0 : i32
    %2 = arith.cmpi ne, %1, %c0_i32_0 : i32
    scf.if %2 {
      %c0_8 = arith.constant 0 : index
      %c0_9 = arith.constant 0 : index
      %11 = vector.load %arg2[%c0_8, %c0_9] : memref<16x256xbf16, #tpu.memory_space<vmem>>, vector<16x256xbf16>
      %c0_10 = arith.constant 0 : index
      %c0_11 = arith.constant 0 : index
      %12 = vector.load %arg3[%c0_10, %c0_11] : memref<256x256xbf16, #tpu.memory_space<vmem>>, vector<256x256xbf16>
      %cst_12 = arith.constant dense<0.000000e+00> : vector<16x256xf32>
      %13 = tpu.matmul %11, %12, %cst_12 {dimension_numbers = #tpu.dot_dimension_numbers<[1], [0], [0], [1], [0, 0, 1, 1], [], []>} : vector<16x256xbf16>, vector<256x256xbf16>, vector<16x256xf32> -> vector<16x256xf32>
      %c0_13 = arith.constant 0 : index
      %c0_14 = arith.constant 0 : index
      %14 = vector.load %arg4[%c0_13, %c0_14] : memref<1x256xf32, #tpu.memory_space<vmem>>, vector<1x256xf32>
      %15 = vector.broadcast %14 : vector<1x256xf32> to vector<16x256xf32>
      %16 = arith.addf %13, %15 : vector<16x256xf32>
      %cst_15 = arith.constant 0.000000e+00 : f32
      %17 = vector.broadcast %cst_15 : f32 to vector<16x256xf32>
      %18 = arith.maximumf %16, %17 : vector<16x256xf32>
      %19 = arith.truncf %18 : vector<16x256xf32> to vector<16x256xbf16>
      %c0_16 = arith.constant 0 : index
      %c0_17 = arith.constant 0 : index
      %20 = vector.load %arg8[%c0_16, %c0_17] : memref<16x256xbf16, #tpu.memory_space<vmem>>, vector<16x256xbf16>
      tpu.vector_store %arg8[%c0_16, %c0_17], %19 {strides = array<i32>} : memref<16x256xbf16, #tpu.memory_space<vmem>>, vector<16x256xbf16>,
    } else {
    }
    %c0 = arith.constant 0 : index
    %c0_1 = arith.constant 0 : index
    %3 = vector.load %arg8[%c0, %c0_1] : memref<16x256xbf16, #tpu.memory_space<vmem>>, vector<16x256xbf16>
    %c0_2 = arith.constant 0 : index
    %c0_3 = arith.constant 0 : index
    %4 = vector.load %arg5[%c0_2, %c0_3] : memref<256x256xbf16, #tpu.memory_space<vmem>>, vector<256x256xbf16>
    %cst = arith.constant dense<0.000000e+00> : vector<16x256xf32>
    %5 = tpu.matmul %3, %4, %cst {dimension_numbers = #tpu.dot_dimension_numbers<[1], [0], [0], [1], [0, 0, 1, 1], [], []>} : vector<16x256xbf16>, vector<256x256xbf16>, vector<16x256xf32> -> vector<16x256xf32>
    %c0_4 = arith.constant 0 : index
    %c0_5 = arith.constant 0 : index
    %6 = vector.load %arg6[%c0_4, %c0_5] : memref<1x256xf32, #tpu.memory_space<vmem>>, vector<1x256xf32>
    %7 = vector.broadcast %6 : vector<1x256xf32> to vector<16x256xf32>
    %8 = arith.addf %5, %7 : vector<16x256xf32>
    %9 = arith.truncf %8 : vector<16x256xf32> to vector<16x256xbf16>
    %c0_6 = arith.constant 0 : index
    %c0_7 = arith.constant 0 : index
    %10 = vector.load %arg7[%c0_6, %c0_7] : memref<16x256xbf16, #tpu.memory_space<vmem>>, vector<16x256xbf16>
    tpu.vector_store %arg7[%c0_6, %c0_7], %9 {strides = array<i32>} : memref<16x256xbf16, #tpu.memory_space<vmem>>, vector<16x256xbf16>,
    return
  }
  func.func @transform_0(%arg0: i32, %arg1: i32) -> (i32, i32) {
    %c0_i32 = arith.constant 0 : i32
    %c0_i32_0 = arith.constant 0 : i32
    return %arg0, %c0_i32 : i32, i32
  }
  func.func @transform_1(%arg0: i32, %arg1: i32) -> (i32, i32) {
    %c0_i32 = arith.constant 0 : i32
    %c0_i32_0 = arith.constant 0 : i32
    %c0_i32_1 = arith.constant 0 : i32
    return %c0_i32, %c0_i32_0 : i32, i32
  }
  func.func @transform_2(%arg0: i32, %arg1: i32) -> (i32, i32) {
    %c0_i32 = arith.constant 0 : i32
    %c0_i32_0 = arith.constant 0 : i32
    %c0_i32_1 = arith.constant 0 : i32
    return %c0_i32, %c0_i32_0 : i32, i32
  }
  func.func @transform_3(%arg0: i32, %arg1: i32) -> (i32, i32) {
    %c0_i32 = arith.constant 0 : i32
    %c0_i32_0 = arith.constant 0 : i32
    return %c0_i32, %arg1 : i32, i32
  }
  func.func @transform_4(%arg0: i32, %arg1: i32) -> (i32, i32) {
    %c0_i32 = arith.constant 0 : i32
    %c0_i32_0 = arith.constant 0 : i32
    return %c0_i32, %arg1 : i32, i32
  }
  func.func @transform_5(%arg0: i32, %arg1: i32) -> (i32, i32) {
    %c0_i32 = arith.constant 0 : i32
    return %arg0, %arg1 : i32, i32
  }
}

</mosaic_0001>

<llo_original>
// kernel: tpu_custom_call.1
$region0: #{tpu_custom_call.1}
  #allocation0 [shape = 'u32[]', space=smem, size = 0x4, offset = 0x4, fixed_abs, tag = 'smem constant byte address 0x4 - core index']
  #allocation1 [shape = 'u32[144,128]{1,0:T(1,128)}', space=vmem, size = 0x12000, scoped, tag = 'internal scratch']
  #allocation2 [shape = 'bf16[16,256]{1,0:T(16,128)(2,1)}', space=vmem, size = 0x2000, scoped, tag = 'scratch operand']
  %s0 = inlined_call_operand.hbm [shape: bf16[16,256], index: 0, kind: input, shape index: {}]
  %s1 = inlined_call_operand.hbm [shape: bf16[256,256], index: 1, kind: input, shape index: {}]
  %s2 = inlined_call_operand.vmem [shape: f32[1,256], index: 2, kind: input, shape index: {}]
  %s3 = inlined_call_operand.hbm [shape: bf16[256,256], index: 3, kind: input, shape index: {}]
  %s4 = inlined_call_operand.vmem [shape: f32[1,256], index: 4, kind: input, shape index: {}]
  %s5 = inlined_call_operand.hbm [shape: bf16[16,256], index: 5, kind: output, shape index: {}]
  %s6 = sld [smem:[#allocation0]]
  $region46: #{tpu_custom_call.1} parent=0
    _
  %s8 = ssub.s32 1, %s6
  %s9 = scalar_select 0, %s8, %s6
  $region1: #{tpu_custom_call.1} parent=0
    #allocation3 [shape = 'u8[8192]{0}', space=vmem, size = 0x2000, scoped, tag = 'input window, operand 0, single buffered']
    #allocation4 [shape = 's32[1]{0}', space=sflag, size = 0x4, scoped, tag = 'scoped memory for tpu_custom_call.1']
    #allocation5 [shape = 's32[1]{0}', space=sflag, size = 0x4, scoped, tag = 'scoped memory for tpu_custom_call.1']
    #allocation6 [shape = 'u8[131072]{0}', space=vmem, size = 0x20000, scoped, tag = 'input window, operand 1, single buffered']
    #allocation7 [shape = 's32[1]{0}', space=sflag, size = 0x4, scoped, tag = 'scoped memory for tpu_custom_call.1']
    #allocation8 [shape = 'u8[131072]{0}', space=vmem, size = 0x20000, scoped, tag = 'input window, operand 3, single buffered']
    #allocation9 [shape = 'u8[8192]{0}', space=vmem, size = 0x2000, scoped, tag = 'output window, operand 0, single buffered']
    %10 = vsyncpa [#allocation4], 0
    %11 = vsyncpa [#allocation7], 0
    %12 = vsyncpa [#allocation5], 0
    // Predicated region
    $region2: #{tpu_custom_call.1} parent=1 // pred_check
      _
    $region3: #{tpu_custom_call.1} parent=1 // pred_check_branch
      %14 = sbr.rel (0) target = $region5
    $region4: #{tpu_custom_call.1} parent=1 // pred_region
      %s16 = ssub.s32 256, 256
      %17 = vsyncadd [#allocation4], %s16
      %s18 = sshll.u32 [#allocation3], 4
      %s19 = int_to_ptr.vmem [resolvable:$true] %s18
      %24 = dma.hbm_to_vmem [thread:$0]  %s0, 256, %s19, [#allocation4], 128, 128, 8
    $region5: #{tpu_custom_call.1} parent=1 // pred_fallthru
      _
    // Predicated region
    $region6: #{tpu_custom_call.1} parent=1 // pred_check
      _
    $region7: #{tpu_custom_call.1} parent=1 // pred_check_branch
      %26 = sbr.rel (0) target = $region9
    $region8: #{tpu_custom_call.1} parent=1 // pred_region
      %s28 = ssub.s32 4096, 4096
      %29 = vsyncadd [#allocation7], %s28
      %s30 = sshll.u32 [#allocation6], 4
      %s31 = int_to_ptr.vmem [resolvable:$true] %s30
      %36 = dma.hbm_to_vmem [thread:$0]  %s1, 4096, %s31, [#allocation7], 128, 128, 8
    $region9: #{tpu_custom_call.1} parent=1 // pred_fallthru
      _
    // Predicated region
    $region10: #{tpu_custom_call.1} parent=1 // pred_check
      _
    $region11: #{tpu_custom_call.1} parent=1 // pred_check_branch
      %38 = sbr.rel (0) target = $region13
    $region12: #{tpu_custom_call.1} parent=1 // pred_region
      _
    $region13: #{tpu_custom_call.1} parent=1 // pred_fallthru
      _
    // Predicated region
    $region14: #{tpu_custom_call.1} parent=1 // pred_check
      _
    $region15: #{tpu_custom_call.1} parent=1 // pred_check_branch
      %40 = sbr.rel (0) target = $region17
    $region16: #{tpu_custom_call.1} parent=1 // pred_region
      %s42 = ssub.s32 4096, 4096
      %43 = vsyncadd [#allocation7], %s42
      %s44 = sshll.u32 [#allocation8], 4
      %s45 = int_to_ptr.vmem [resolvable:$true] %s44
      %50 = dma.hbm_to_vmem [thread:$0]  %s3, 4096, %s45, [#allocation7], 128, 128, 8
    $region17: #{tpu_custom_call.1} parent=1 // pred_fallthru
      _
    // Predicated region
    $region18: #{tpu_custom_call.1} parent=1 // pred_check
      _
    $region19: #{tpu_custom_call.1} parent=1 // pred_check_branch
      %52 = sbr.rel (0) target = $region21
    $region20: #{tpu_custom_call.1} parent=1 // pred_region
      _
    $region21: #{tpu_custom_call.1} parent=1 // pred_fallthru
      _
    // Predicated region
    $region22: #{tpu_custom_call.1} parent=1 // pred_check
      _
    $region23: #{tpu_custom_call.1} parent=1 // pred_check_branch
      %54 = sbr.rel (0) target = $region25
    $region24: #{tpu_custom_call.1} parent=1 // pred_region
      %55 = dma.done [#allocation4], 256
    $region25: #{tpu_custom_call.1} parent=1 // pred_fallthru
      _
    // Predicated region
    $region26: #{tpu_custom_call.1} parent=1 // pred_check
      _
    $region27: #{tpu_custom_call.1} parent=1 // pred_check_branch
      %57 = sbr.rel (0) target = $region29
    $region28: #{tpu_custom_call.1} parent=1 // pred_region
      %58 = dma.done [#allocation7], 4096
    $region29: #{tpu_custom_call.1} parent=1 // pred_fallthru
      _
    // Predicated region
    $region30: #{tpu_custom_call.1} parent=1 // pred_check
      _
    $region31: #{tpu_custom_call.1} parent=1 // pred_check_branch
      %60 = sbr.rel (0) target = $region33
    $region32: #{tpu_custom_call.1} parent=1 // pred_region
      %61 = dma.done [#allocation7], 4096
    $region33: #{tpu_custom_call.1} parent=1 // pred_fallthru
      _
    %p62 = scmp.eq.s32.totalorder 0, 0
    // Predicated region
    $region34: #{tpu_custom_call.1} parent=1 // pred_check
      %p63 = pneg %p62
    $region35: #{tpu_custom_call.1} parent=1 // pred_check_branch
      %65 = sbr.rel (%p63) target = $region37
    $region36: #{tpu_custom_call.1} parent=1 // pred_region
      %v66 = vld [vmem:[#allocation3] sm:$0xff]
      %v67 = vld [vmem:[#allocation3 + $0x8] sm:$0xff]
      %v68 = vld [vmem:[#allocation6] sm:$0xff]
      %v69 = vld [vmem:[#allocation6 + $0x8] sm:$0xff]
      %v70 = vld [vmem:[#allocation6 + $0x10] sm:$0xff]
      %v71 = vld [vmem:[#allocation6 + $0x18] sm:$0xff]
      %v72 = vld [vmem:[#allocation6 + $0x20] sm:$0xff]
      %v73 = vld [vmem:[#allocation6 + $0x28] sm:$0xff]
      %v74 = vld [vmem:[#allocation6 + $0x30] sm:$0xff]
      %v75 = vld [vmem:[#allocation6 + $0x38] sm:$0xff]
      %v76 = vld [vmem:[#allocation6 + $0x40] sm:$0xff]
      %v77 = vld [vmem:[#allocation6 + $0x48] sm:$0xff]
      %v78 = vld [vmem:[#allocation6 + $0x50] sm:$0xff]
      %v79 = vld [vmem:[#allocation6 + $0x58] sm:$0xff]
      %v80 = vld [vmem:[#allocation6 + $0x60] sm:$0xff]
      %v81 = vld [vmem:[#allocation6 + $0x68] sm:$0xff]
      %v82 = vld [vmem:[#allocation6 + $0x70] sm:$0xff]
      %v83 = vld [vmem:[#allocation6 + $0x78] sm:$0xff]
      %v84 = vld [vmem:[#allocation6 + $0x80] sm:$0xff]
      %v85 = vld [vmem:[#allocation6 + $0x88] sm:$0xff]
      %v86 = vld [vmem:[#allocation6 + $0x90] sm:$0xff]
      %v87 = vld [vmem:[#allocation6 + $0x98] sm:$0xff]
      %v88 = vld [vmem:[#allocation6 + $0xa0] sm:$0xff]
      %v89 = vld [vmem:[#allocation6 + $0xa8] sm:$0xff]
      %v90 = vld [vmem:[#allocation6 + $0xb0] sm:$0xff]
      %v91 = vld [vmem:[#allocation6 + $0xb8] sm:$0xff]
      %v92 = vld [vmem:[#allocation6 + $0xc0] sm:$0xff]
      %v93 = vld [vmem:[#allocation6 + $0xc8] sm:$0xff]
      %v94 = vld [vmem:[#allocation6 + $0xd0] sm:$0xff]
      %v95 = vld [vmem:[#allocation6 + $0xd8] sm:$0xff]
      %v96 = vld [vmem:[#allocation6 + $0xe0] sm:$0xff]
      %v97 = vld [vmem:[#allocation6 + $0xe8] sm:$0xff]
      %v98 = vld [vmem:[#allocation6 + $0xf0] sm:$0xff]
      %v99 = vld [vmem:[#allocation6 + $0xf8] sm:$0xff]
      %v100 = vld [vmem:[%s2] sm:$0x3]
      %v102 = vlaneseq
      %v103 = vshrl.u32 %v102, 7
      %v104 = vsub.s32 0, %v103
      %v105 = vrot.slane %v100, %v104
      %v106 = vlaneseq
      %v107 = vshrl.u32 %v106, 7
      %v108 = vsub.s32 1, %v107
      %v109 = vrot.slane %v100, %v108
      %v114 = vunpack.c.l.b16 %v66
      %v115 = vunpack.c.h.b16 %v66
      %v116 = vunpack.c.l.b16 %v67
      %v117 = vunpack.c.h.b16 %v67
      %v118 = vpack.c.b16 %v116, %v114
      %v119 = vpack.c.b16 %v117, %v115
      %v154 = vunpack.c.l.b16 %v68
      %v155 = vunpack.c.h.b16 %v68
      %v156 = vunpack.c.l.b16 %v69
      %v157 = vunpack.c.h.b16 %v69
      %v158 = vunpack.c.l.b16 %v70
      %v159 = vunpack.c.h.b16 %v70
      %v160 = vunpack.c.l.b16 %v71
      %v161 = vunpack.c.h.b16 %v71
      %v162 = vunpack.c.l.b16 %v72
      %v163 = vunpack.c.h.b16 %v72
      %v164 = vunpack.c.l.b16 %v73
      %v165 = vunpack.c.h.b16 %v73
      %v166 = vunpack.c.l.b16 %v74
      %v167 = vunpack.c.h.b16 %v74
      %v168 = vunpack.c.l.b16 %v75
      %v169 = vunpack.c.h.b16 %v75
      %v170 = vunpack.c.l.b16 %v76
      %v171 = vunpack.c.h.b16 %v76
      %v172 = vunpack.c.l.b16 %v77
      %v173 = vunpack.c.h.b16 %v77
      %v174 = vunpack.c.l.b16 %v78
      %v175 = vunpack.c.h.b16 %v78
      %v176 = vunpack.c.l.b16 %v79
      %v177 = vunpack.c.h.b16 %v79
      %v178 = vunpack.c.l.b16 %v80
      %v179 = vunpack.c.h.b16 %v80
      %v180 = vunpack.c.l.b16 %v81
      %v181 = vunpack.c.h.b16 %v81
      %v182 = vunpack.c.l.b16 %v82
      %v183 = vunpack.c.h.b16 %v82
      %v184 = vunpack.c.l.b16 %v83
      %v185 = vunpack.c.h.b16 %v83
      %v186 = vunpack.c.l.b16 %v84
      %v187 = vunpack.c.h.b16 %v84
      %v188 = vunpack.c.l.b16 %v85
      %v189 = vunpack.c.h.b16 %v85
      %v190 = vunpack.c.l.b16 %v86
      %v191 = vunpack.c.h.b16 %v86
      %v192 = vunpack.c.l.b16 %v87
      %v193 = vunpack.c.h.b16 %v87
      %v194 = vunpack.c.l.b16 %v88
      %v195 = vunpack.c.h.b16 %v88
      %v196 = vunpack.c.l.b16 %v89
      %v197 = vunpack.c.h.b16 %v89
      %v198 = vunpack.c.l.b16 %v90
      %v199 = vunpack.c.h.b16 %v90
      %v200 = vunpack.c.l.b16 %v91
      %v201 = vunpack.c.h.b16 %v91
      %v202 = vunpack.c.l.b16 %v92
      %v203 = vunpack.c.h.b16 %v92
      %v204 = vunpack.c.l.b16 %v93
      %v205 = vunpack.c.h.b16 %v93
      %v206 = vunpack.c.l.b16 %v94
      %v207 = vunpack.c.h.b16 %v94
      %v208 = vunpack.c.l.b16 %v95
      %v209 = vunpack.c.h.b16 %v95
      %v210 = vunpack.c.l.b16 %v96
      %v211 = vunpack.c.h.b16 %v96
      %v212 = vunpack.c.l.b16 %v97
      %v213 = vunpack.c.h.b16 %v97
      %v214 = vunpack.c.l.b16 %v98
      %v215 = vunpack.c.h.b16 %v98
      %v216 = vunpack.c.l.b16 %v99
      %v217 = vunpack.c.h.b16 %v99
      %v218 = vpack.c.b16 %v156, %v154
      %v219 = vpack.c.b16 %v157, %v155
      %v220 = vpack.c.b16 %v160, %v158
      %v221 = vpack.c.b16 %v161, %v159
      %v222 = vpack.c.b16 %v164, %v162
      %v223 = vpack.c.b16 %v165, %v163
      %v224 = vpack.c.b16 %v168, %v166
      %v225 = vpack.c.b16 %v169, %v167
      %v226 = vpack.c.b16 %v172, %v170
      %v227 = vpack.c.b16 %v173, %v171
      %v228 = vpack.c.b16 %v176, %v174
      %v229 = vpack.c.b16 %v177, %v175
      %v230 = vpack.c.b16 %v180, %v178
      %v231 = vpack.c.b16 %v181, %v179
      %v232 = vpack.c.b16 %v184, %v182
      %v233 = vpack.c.b16 %v185, %v183
      %v234 = vpack.c.b16 %v188, %v186
      %v235 = vpack.c.b16 %v189, %v187
      %v236 = vpack.c.b16 %v192, %v190
      %v237 = vpack.c.b16 %v193, %v191
      %v238 = vpack.c.b16 %v196, %v194
      %v239 = vpack.c.b16 %v197, %v195
      %v240 = vpack.c.b16 %v200, %v198
      %v241 = vpack.c.b16 %v201, %v199
      %v242 = vpack.c.b16 %v204, %v202
      %v243 = vpack.c.b16 %v205, %v203
      %v244 = vpack.c.b16 %v208, %v206
      %v245 = vpack.c.b16 %v209, %v207
      %v246 = vpack.c.b16 %v212, %v210
      %v247 = vpack.c.b16 %v213, %v211
      %v248 = vpack.c.b16 %v216, %v214
      %v249 = vpack.c.b16 %v217, %v215
      %282 = vmatprep.subr.bf16.mxu0 %v219
      %283 = vmatpush1.bf16.msra.mxu0 %v218
      %284 = vmatprep.subr.bf16.mxu0 %v221
      %285 = vmatpush1.bf16.msra.mxu0 %v220
      %286 = vmatprep.subr.bf16.mxu0 %v223
      %287 = vmatpush1.bf16.msra.mxu0 %v222
      %288 = vmatprep.subr.bf16.mxu0 %v225
      %289 = vmatpush1.bf16.msra.mxu0 %v224
      %290 = vmatprep.subr.bf16.mxu0 %v227
      %291 = vmatpush1.bf16.msra.mxu0 %v226
      %292 = vmatprep.subr.bf16.mxu0 %v229
      %293 = vmatpush1.bf16.msra.mxu0 %v228
      %294 = vmatprep.subr.bf16.mxu0 %v231
      %295 = vmatpush1.bf16.msra.mxu0 %v230
      %296 = vmatprep.subr.bf16.mxu0 %v233
      %297 = vmatpush1.bf16.msra.mxu0 %v232
      %298 = vmatprep.subr.bf16.mxu0 %v235
      %299 = vmatpush1.bf16.msra.mxu0 %v234
      %300 = vmatprep.subr.bf16.mxu0 %v237
      %301 = vmatpush1.bf16.msra.mxu0 %v236
      %302 = vmatprep.subr.bf16.mxu0 %v239
      %303 = vmatpush1.bf16.msra.mxu0 %v238
      %304 = vmatprep.subr.bf16.mxu0 %v241
      %305 = vmatpush1.bf16.msra.mxu0 %v240
      %306 = vmatprep.subr.bf16.mxu0 %v243
      %307 = vmatpush1.bf16.msra.mxu0 %v242
      %308 = vmatprep.subr.bf16.mxu0 %v245
      %309 = vmatpush1.bf16.msra.mxu0 %v244
      %310 = vmatprep.subr.bf16.mxu0 %v247
      %311 = vmatpush1.bf16.msra.mxu0 %v246
      %312 = vmatprep.subr.bf16.mxu0 %v249
      %313 = vmatpush1.bf16.msra.mxu0 %v248
      %314 = vmatprep.mubr.bf16.mxu0 %v119
      %315 = vmatmul.mubr.bf16.gmra.mrb[0].mxu0 %v118
      %v316 = vpop.f32.mrb[0].mxu0
      %v317 = vadd.f32 %v105, %v316
      %v318 = vpop.f32.mrb[0].mxu0
      %v319 = vadd.f32 %v109, %v318
      %v320 = vpop.f32.mrb[0].mxu0
      %v321 = vadd.f32 %v105, %v320
      %v322 = vpop.f32.mrb[0].mxu0
      %v323 = vadd.f32 %v109, %v322
      %324 = vdwg.mxu0
      %v325 = vmax.f32 %v317, 0.0
      %v326 = vmax.f32 %v319, 0.0
      %v327 = vmax.f32 %v321, 0.0
      %v328 = vmax.f32 %v323, 0.0
      %v329 = vpack.c.bf16 %v327, %v325
      %v330 = vpack.c.bf16 %v328, %v326
      %331 = vst [vmem:[#allocation2] sm:$0xff] %v329
      %332 = vst [vmem:[#allocation2 + $0x8] sm:$0xff] %v330
    $region37: #{tpu_custom_call.1} parent=1 // pred_fallthru
      _
    %v333 = vld [vmem:[#allocation2] sm:$0xff]
    %v334 = vld [vmem:[#allocation2 + $0x8] sm:$0xff]
    %v335 = vld [vmem:[#allocation8] sm:$0xff]
    %v336 = vld [vmem:[#allocation8 + $0x8] sm:$0xff]
    %v337 = vld [vmem:[#allocation8 + $0x10] sm:$0xff]
    %v338 = vld [vmem:[#allocation8 + $0x18] sm:$0xff]
    %v339 = vld [vmem:[#allocation8 + $0x20] sm:$0xff]
    %v340 = vld [vmem:[#allocation8 + $0x28] sm:$0xff]
    %v341 = vld [vmem:[#allocation8 + $0x30] sm:$0xff]
    %v342 = vld [vmem:[#allocation8 + $0x38] sm:$0xff]
    %v343 = vld [vmem:[#allocation8 + $0x40] sm:$0xff]
    %v344 = vld [vmem:[#allocation8 + $0x48] sm:$0xff]
    %v345 = vld [vmem:[#allocation8 + $0x50] sm:$0xff]
    %v346 = vld [vmem:[#allocation8 + $0x58] sm:$0xff]
    %v347 = vld [vmem:[#allocation8 + $0x60] sm:$0xff]
    %v348 = vld [vmem:[#allocation8 + $0x68] sm:$0xff]
    %v349 = vld [vmem:[#allocation8 + $0x70] sm:$0xff]
    %v350 = vld [vmem:[#allocation8 + $0x78] sm:$0xff]
    %v351 = vld [vmem:[#allocation8 + $0x80] sm:$0xff]
    %v352 = vld [vmem:[#allocation8 + $0x88] sm:$0xff]
    %v353 = vld [vmem:[#allocation8 + $0x90] sm:$0xff]
    %v354 = vld [vmem:[#allocation8 + $0x98] sm:$0xff]
    %v355 = vld [vmem:[#allocation8 + $0xa0] sm:$0xff]
    %v356 = vld [vmem:[#allocation8 + $0xa8] sm:$0xff]
    %v357 = vld [vmem:[#allocation8 + $0xb0] sm:$0xff]
    %v358 = vld [vmem:[#allocation8 + $0xb8] sm:$0xff]
    %v359 = vld [vmem:[#allocation8 + $0xc0] sm:$0xff]
    %v360 = vld [vmem:[#allocation8 + $0xc8] sm:$0xff]
    %v361 = vld [vmem:[#allocation8 + $0xd0] sm:$0xff]
    %v362 = vld [vmem:[#allocation8 + $0xd8] sm:$0xff]
    %v363 = vld [vmem:[#allocation8 + $0xe0] sm:$0xff]
    %v364 = vld [vmem:[#allocation8 + $0xe8] sm:$0xff]
    %v365 = vld [vmem:[#allocation8 + $0xf0] sm:$0xff]
    %v366 = vld [vmem:[#allocation8 + $0xf8] sm:$0xff]
    %v367 = vld [vmem:[%s4] sm:$0x3]
    %v369 = vlaneseq
    %v370 = vshrl.u32 %v369, 7
    %v371 = vsub.s32 0, %v370
    %v372 = vrot.slane %v367, %v371
    %v373 = vlaneseq
    %v374 = vshrl.u32 %v373, 7
    %v375 = vsub.s32 1, %v374
    %v376 = vrot.slane %v367, %v375
    %v411 = vunpack.c.l.b16 %v335
    %v412 = vunpack.c.h.b16 %v335
    %v413 = vunpack.c.l.b16 %v336
    %v414 = vunpack.c.h.b16 %v336
    %v415 = vunpack.c.l.b16 %v337
    %v416 = vunpack.c.h.b16 %v337
    %v417 = vunpack.c.l.b16 %v338
    %v418 = vunpack.c.h.b16 %v338
    %v419 = vunpack.c.l.b16 %v339
    %v420 = vunpack.c.h.b16 %v339
    %v421 = vunpack.c.l.b16 %v340
    %v422 = vunpack.c.h.b16 %v340
    %v423 = vunpack.c.l.b16 %v341
    %v424 = vunpack.c.h.b16 %v341
    %v425 = vunpack.c.l.b16 %v342
    %v426 = vunpack.c.h.b16 %v342
    %v427 = vunpack.c.l.b16 %v343
    %v428 = vunpack.c.h.b16 %v343
    %v429 = vunpack.c.l.b16 %v344
    %v430 = vunpack.c.h.b16 %v344
    %v431 = vunpack.c.l.b16 %v345
    %v432 = vunpack.c.h.b16 %v345
    %v433 = vunpack.c.l.b16 %v346
    %v434 = vunpack.c.h.b16 %v346
    %v435 = vunpack.c.l.b16 %v347
    %v436 = vunpack.c.h.b16 %v347
    %v437 = vunpack.c.l.b16 %v348
    %v438 = vunpack.c.h.b16 %v348
    %v439 = vunpack.c.l.b16 %v349
    %v440 = vunpack.c.h.b16 %v349
    %v441 = vunpack.c.l.b16 %v350
    %v442 = vunpack.c.h.b16 %v350
    %v443 = vunpack.c.l.b16 %v351
    %v444 = vunpack.c.h.b16 %v351
    %v445 = vunpack.c.l.b16 %v352
    %v446 = vunpack.c.h.b16 %v352
    %v447 = vunpack.c.l.b16 %v353
    %v448 = vunpack.c.h.b16 %v353
    %v449 = vunpack.c.l.b16 %v354
    %v450 = vunpack.c.h.b16 %v354
    %v451 = vunpack.c.l.b16 %v355
    %v452 = vunpack.c.h.b16 %v355
    %v453 = vunpack.c.l.b16 %v356
    %v454 = vunpack.c.h.b16 %v356
    %v455 = vunpack.c.l.b16 %v357
    %v456 = vunpack.c.h.b16 %v357
    %v457 = vunpack.c.l.b16 %v358
    %v458 = vunpack.c.h.b16 %v358
    %v459 = vunpack.c.l.b16 %v359
    %v460 = vunpack.c.h.b16 %v359
    %v461 = vunpack.c.l.b16 %v360
    %v462 = vunpack.c.h.b16 %v360
    %v463 = vunpack.c.l.b16 %v361
    %v464 = vunpack.c.h.b16 %v361
    %v465 = vunpack.c.l.b16 %v362
    %v466 = vunpack.c.h.b16 %v362
    %v467 = vunpack.c.l.b16 %v363
    %v468 = vunpack.c.h.b16 %v363
    %v469 = vunpack.c.l.b16 %v364
    %v470 = vunpack.c.h.b16 %v364
    %v471 = vunpack.c.l.b16 %v365
    %v472 = vunpack.c.h.b16 %v365
    %v473 = vunpack.c.l.b16 %v366
    %v474 = vunpack.c.h.b16 %v366
    %v475 = vpack.c.b16 %v413, %v411
    %v476 = vpack.c.b16 %v414, %v412
    %v477 = vpack.c.b16 %v417, %v415
    %v478 = vpack.c.b16 %v418, %v416
    %v479 = vpack.c.b16 %v421, %v419
    %v480 = vpack.c.b16 %v422, %v420
    %v481 = vpack.c.b16 %v425, %v423
    %v482 = vpack.c.b16 %v426, %v424
    %v483 = vpack.c.b16 %v429, %v427
    %v484 = vpack.c.b16 %v430, %v428
    %v485 = vpack.c.b16 %v433, %v431
    %v486 = vpack.c.b16 %v434, %v432
    %v487 = vpack.c.b16 %v437, %v435
    %v488 = vpack.c.b16 %v438, %v436
    %v489 = vpack.c.b16 %v441, %v439
    %v490 = vpack.c.b16 %v442, %v440
    %v491 = vpack.c.b16 %v445, %v443
    %v492 = vpack.c.b16 %v446, %v444
    %v493 = vpack.c.b16 %v449, %v447
    %v494 = vpack.c.b16 %v450, %v448
    %v495 = vpack.c.b16 %v453, %v451
    %v496 = vpack.c.b16 %v454, %v452
    %v497 = vpack.c.b16 %v457, %v455
    %v498 = vpack.c.b16 %v458, %v456
    %v499 = vpack.c.b16 %v461, %v459
    %v500 = vpack.c.b16 %v462, %v460
    %v501 = vpack.c.b16 %v465, %v463
    %v502 = vpack.c.b16 %v466, %v464
    %v503 = vpack.c.b16 %v469, %v467
    %v504 = vpack.c.b16 %v470, %v468
    %v505 = vpack.c.b16 %v473, %v471
    %v506 = vpack.c.b16 %v474, %v472
    %539 = vmatprep.subr.bf16.mxu0 %v476
    %540 = vmatpush1.bf16.msra.mxu0 %v475
    %541 = vmatprep.subr.bf16.mxu0 %v478
    %542 = vmatpush1.bf16.msra.mxu0 %v477
    %543 = vmatprep.subr.bf16.mxu0 %v480
    %544 = vmatpush1.bf16.msra.mxu0 %v479
    %545 = vmatprep.subr.bf16.mxu0 %v482
    %546 = vmatpush1.bf16.msra.mxu0 %v481
    %547 = vmatprep.subr.bf16.mxu0 %v484
    %548 = vmatpush1.bf16.msra.mxu0 %v483
    %549 = vmatprep.subr.bf16.mxu0 %v486
    %550 = vmatpush1.bf16.msra.mxu0 %v485
    %551 = vmatprep.subr.bf16.mxu0 %v488
    %552 = vmatpush1.bf16.msra.mxu0 %v487
    %553 = vmatprep.subr.bf16.mxu0 %v490
    %554 = vmatpush1.bf16.msra.mxu0 %v489
    %555 = vmatprep.subr.bf16.mxu0 %v492
    %556 = vmatpush1.bf16.msra.mxu0 %v491
    %557 = vmatprep.subr.bf16.mxu0 %v494
    %558 = vmatpush1.bf16.msra.mxu0 %v493
    %559 = vmatprep.subr.bf16.mxu0 %v496
    %560 = vmatpush1.bf16.msra.mxu0 %v495
    %561 = vmatprep.subr.bf16.mxu0 %v498
    %562 = vmatpush1.bf16.msra.mxu0 %v497
    %563 = vmatprep.subr.bf16.mxu0 %v500
    %564 = vmatpush1.bf16.msra.mxu0 %v499
    %565 = vmatprep.subr.bf16.mxu0 %v502
    %566 = vmatpush1.bf16.msra.mxu0 %v501
    %567 = vmatprep.subr.bf16.mxu0 %v504
    %568 = vmatpush1.bf16.msra.mxu0 %v503
    %569 = vmatprep.subr.bf16.mxu0 %v506
    %570 = vmatpush1.bf16.msra.mxu0 %v505
    %571 = vmatprep.mubr.bf16.mxu0 %v334
    %572 = vmatmul.mubr.bf16.gmra.mrb[0].mxu0 %v333
    %v573 = vpop.f32.mrb[0].mxu0
    %v574 = vadd.f32 %v372, %v573
    %v575 = vpop.f32.mrb[0].mxu0
    %v576 = vadd.f32 %v376, %v575
    %v577 = vpop.f32.mrb[0].mxu0
    %v578 = vadd.f32 %v372, %v577
    %v579 = vpop.f32.mrb[0].mxu0
    %v580 = vadd.f32 %v376, %v579
    %581 = vdwg.mxu0
    %v582 = vpack.c.bf16 %v578, %v574
    %v583 = vpack.c.bf16 %v580, %v576
    %v586 = vunpack.c.l.b16 %v582
    %v587 = vunpack.c.l.b16 %v583
    %v588 = vunpack.c.h.b16 %v582
    %v589 = vunpack.c.h.b16 %v583
    %v590 = vpack.c.b16 %v587, %v586
    %v591 = vpack.c.b16 %v589, %v588
    %594 = vst [vmem:[#allocation9] sm:$0xff] %v590
    %595 = vst [vmem:[#allocation9 + $0x8] sm:$0xff] %v591
    // Predicated region
    $region38: #{tpu_custom_call.1} parent=1 // pred_check
      _
    $region39: #{tpu_custom_call.1} parent=1 // pred_check_branch
      %597 = sbr.rel (0) target = $region41
    $region40: #{tpu_custom_call.1} parent=1 // pred_region
      %s599 = ssub.s32 256, 256
      %600 = vsyncadd [#allocation5], %s599
      %s601 = sshll.u32 [#allocation9], 4
      %s602 = int_to_ptr.vmem [resolvable:$true] %s601
      %607 = dma.vmem_to_hbm [thread:$0]  %s602, 256, %s5, [#allocation5], 128, 128, 8
    $region41: #{tpu_custom_call.1} parent=1 // pred_fallthru
      _
    // Predicated region
    $region42: #{tpu_custom_call.1} parent=1 // pred_check
      _
    $region43: #{tpu_custom_call.1} parent=1 // pred_check_branch
      %609 = sbr.rel (0) target = $region45
    $region44: #{tpu_custom_call.1} parent=1 // pred_region
      %610 = dma.done [#allocation5], 256
    $region45: #{tpu_custom_call.1} parent=1 // pred_fallthru
      _
    %611 = vsyncpa [#allocation4], 1
    %612 = vsyncpa [#allocation7], 1
    %613 = vsyncpa [#allocation5], 1

</llo_original>
